<compile_context>
chip_gen: v6e
topology: v6e:2x2x1
jax: 0.10.0
libtpu: 0.0.40
codegen_flags: <defaults>
</compile_context>

<pallas_src>
import jax
import jax.numpy as jnp
from jax.experimental import pallas as pl
from jax.experimental.pallas import tpu as pltpu


# --------------------------------------------------------------------------
# Kernel 1: fused QKV projection (one lane-dense GEMM, scale folded into Wq)
# --------------------------------------------------------------------------
def _qkv_proj_kernel(x_ref, w_ref, qkv_ref):
    # x_ref:   (1, TN, dim)      bf16
    # w_ref:   (dim, 3*inner)    bf16 (constant index_map -> fetched once)
    # qkv_ref: (1, TN, 3*inner)  bf16
    qkv_ref[0] = jnp.dot(
        x_ref[0], w_ref[...], preferred_element_type=jnp.float32
    ).astype(qkv_ref.dtype)


# --------------------------------------------------------------------------
# Kernel 2: per-head-group attention + distributed output projection
# --------------------------------------------------------------------------
def _attn_kernel(q_ref, k_ref, v_ref, wo_ref, bias_ref, o_ref, acc_ref):
    # q_ref:   (1, G, TQ, d)   bf16  (softmax scale already folded into Wq)
    # k_ref:   (1, G, N,  d)   bf16
    # v_ref:   (1, G, N,  d)   bf16
    # wo_ref:  (H, d, dim)     bf16  full output projection, VMEM-resident
    # bias_ref:(1, dim)        f32
    # o_ref:   (1, TQ, dim)
    # acc_ref: (TQ, dim)       f32   head-group accumulator (resident over hg)
    hg = pl.program_id(2)
    G = q_ref.shape[1]

    @pl.when(hg == 0)
    def _init():
        acc_ref[...] = jnp.broadcast_to(
            bias_ref[...].astype(jnp.float32), acc_ref.shape)

    q = q_ref[0]                                   # (G, TQ, d)
    k = k_ref[0]                                   # (G, N,  d)
    v = v_ref[0]                                   # (G, N,  d)

    # Batched scores, contracting the last dims of both -> no K transpose.
    dots = jnp.einsum("gqd,gkd->gqk", q, k,
                      preferred_element_type=jnp.float32)   # (G, TQ, N)

    # Numerically-stable softmax; normalization is deferred past the PV matmul
    # so the VPU multiply is on a (G,TQ,d) tile instead of (G,TQ,N).
    m = jnp.max(dots, axis=-1, keepdims=True)
    e = jnp.exp(dots - m)
    denom = jnp.sum(e, axis=-1, keepdims=True)               # (G, TQ, 1)

    pv = jnp.einsum("gqk,gkd->gqd", e.astype(jnp.bfloat16), v,
                    preferred_element_type=jnp.float32)      # (G, TQ, d)
    head_out = (pv * pl.reciprocal(denom, approx=True)).astype(jnp.bfloat16)

    # This head group's slice of the resident output projection.
    wo = wo_ref[pl.ds(hg * G, G)]                             # (G, d, dim)

    # Accumulate the group's projection in registers, then touch the VMEM
    # accumulator exactly once per step.
    proj = jnp.dot(head_out[0], wo[0], preferred_element_type=jnp.float32)
    for g in range(1, G):
        proj += jnp.dot(head_out[g], wo[g], preferred_element_type=jnp.float32)
    acc_ref[...] += proj

    @pl.when(hg == pl.num_programs(2) - 1)
    def _finalize():
        o_ref[0] = acc_ref[...].astype(o_ref.dtype)


# --------------------------------------------------------------------------
# Helpers
# --------------------------------------------------------------------------
def _pick_tile(n):
    """Largest tile <= 128 that divides n (falls back to the full dim, which
    is always a legal block; e.g. ViT's prime N=197 -> a single query tile).
    On v6e with large N this cap could be raised to 256+ (128 MiB VMEM)."""
    if n <= 128:
        return n
    for t in (128, 64, 32, 16, 8):
        if n % t == 0:
            return t
    return n


def _heads_per_group(heads, dim_head):
    """Batch heads per grid step so the group is ~128 lanes wide (4 for d=32,
    2 for d=64); must divide `heads`."""
    g = max(1, 128 // max(dim_head, 1))
    g = min(g, heads)
    while heads % g:
        g -= 1
    return g


# --------------------------------------------------------------------------
# Wrapper
# --------------------------------------------------------------------------
def attention_pallas(x, w_qkv_t, w_out_t, b_out, *, heads, dim_head):
    """x: (B, N, dim); w_qkv_t: (dim, 3*H*d); w_out_t: (H*d, dim); b_out: (dim,)."""
    B, N, dim = x.shape
    inner = heads * dim_head
    assert w_qkv_t.shape == (dim, 3 * inner)
    assert w_out_t.shape == (inner, dim)
    scale = dim_head ** (-0.5)
    out_dtype = x.dtype

    # --- host-side parameter prep (layout plumbing, done once) ---
    # Fold the softmax scale into the Wq third of the fused QKV weight (free).
    wqkv = (w_qkv_t.astype(jnp.float32)
            .at[:, :inner].multiply(scale)
            .astype(jnp.bfloat16))                        # (dim, 3*inner)
    wo_h = w_out_t.reshape(heads, dim_head, dim).astype(jnp.bfloat16)  # (H, d, dim)
    bias2d = b_out.reshape(1, dim).astype(jnp.float32)
    xb = x.astype(jnp.bfloat16)

    # ---------------- kernel 1: fused QKV projection ----------------
    tn = _pick_tile(N)
    nt = N // tn
    qkv = pl.pallas_call(
        _qkv_proj_kernel,
        out_shape=jax.ShapeDtypeStruct((B, N, 3 * inner), jnp.bfloat16),
        grid_spec=pltpu.PrefetchScalarGridSpec(
            num_scalar_prefetch=0,
            grid=(B, nt),
            in_specs=[
                pl.BlockSpec((1, tn, dim), lambda b, ni: (b, ni, 0)),
                pl.BlockSpec((dim, 3 * inner), lambda b, ni: (0, 0)),  # resident
            ],
            out_specs=pl.BlockSpec((1, tn, 3 * inner), lambda b, ni: (b, ni, 0)),
        ),
        compiler_params=pltpu.CompilerParams(
            dimension_semantics=("parallel", "parallel"),
            vmem_limit_bytes=32 * 1024 * 1024,
        ),
    )(xb, wqkv)

    # 'b n (three h d) -> three, (b, h, n, d)'  (cheap XLA layout plumbing)
    qkv = qkv.reshape(B, N, 3, heads, dim_head).transpose(2, 0, 3, 1, 4)
    q, k, v = qkv[0], qkv[1], qkv[2]               # each (B, H, N, d) bf16

    # ---------------- kernel 2: attention + output projection ----------------
    G = _heads_per_group(heads, dim_head)
    n_groups = heads // G
    tq = _pick_tile(N)
    qt = N // tq
    grid = (B, qt, n_groups)                       # B*qt parallel units

    return pl.pallas_call(
        _attn_kernel,
        out_shape=jax.ShapeDtypeStruct((B, N, dim), out_dtype),
        grid_spec=pltpu.PrefetchScalarGridSpec(
            num_scalar_prefetch=0,
            grid=grid,
            in_specs=[
                pl.BlockSpec((1, G, tq, dim_head),
                             lambda b, qi, h: (b, h, qi, 0)),           # Q tile
                pl.BlockSpec((1, G, N, dim_head),
                             lambda b, qi, h: (b, h, 0, 0)),            # K group
                pl.BlockSpec((1, G, N, dim_head),
                             lambda b, qi, h: (b, h, 0, 0)),            # V group
                pl.BlockSpec((heads, dim_head, dim),
                             lambda b, qi, h: (0, 0, 0)),               # Wo (resident)
                pl.BlockSpec((1, dim), lambda b, qi, h: (0, 0)),        # bias
            ],
            out_specs=pl.BlockSpec((1, tq, dim), lambda b, qi, h: (b, qi, 0)),
            scratch_shapes=[pltpu.VMEM((tq, dim), jnp.float32)],
        ),
        compiler_params=pltpu.CompilerParams(
            dimension_semantics=("parallel", "parallel", "arbitrary"),
            vmem_limit_bytes=32 * 1024 * 1024,
        ),
    )(q, k, v, wo_h, bias2d)


# --------------------------------------------------------------------------
# Pure-JAX reference (f32), mirroring the PyTorch forward (eval mode)
# --------------------------------------------------------------------------
def attention_reference(x, w_qkv_t, w_out_t, b_out, *, heads, dim_head):
    B, N, dim = x.shape
    scale = dim_head ** (-0.5)
    qkv = x @ w_qkv_t                                     # (B, N, 3*inner)
    q, k, v = jnp.split(qkv, 3, axis=-1)

    def to_heads(t):                                      # 'b n (h d) -> b h n d'
        return t.reshape(B, N, heads, dim_head).transpose(0, 2, 1, 3)

    q, k, v = map(to_heads, (q, k, v))
    dots = jnp.einsum("bhnd,bhmd->bhnm", q, k) * scale
    attn = jax.nn.softmax(dots, axis=-1)
    out = jnp.einsum("bhnm,bhmd->bhnd", attn, v)
    out = out.transpose(0, 2, 1, 3).reshape(B, N, heads * dim_head)
    return out @ w_out_t + b_out


if __name__ == "__main__":
    # Small shapes consistent with the module; dim=128 keeps output stores
    # lane-dense, heads=4 / dim_head=32 exercises head-group batching (G=4).
    B, N, dim = 2, 16, 128
    heads, dim_head = 4, 32
    inner = heads * dim_head

    key = jax.random.PRNGKey(0)
    kx, kq, ko, kb = jax.random.split(key, 4)

    x = jax.random.normal(kx, (B, N, dim), dtype=jnp.float32)
    # PyTorch params: to_qkv.weight (3*inner, dim), to_out[0].weight (dim, inner),
    # to_out[0].bias (dim,) -- stored pre-transposed for right-multiplication.
    w_qkv_t = jax.random.normal(kq, (dim, 3 * inner), dtype=jnp.float32) * 0.05
    w_out_t = jax.random.normal(ko, (inner, dim), dtype=jnp.float32) * 0.05
    b_out = jax.random.normal(kb, (dim,), dtype=jnp.float32) * 0.05

    y = attention_pallas(x, w_qkv_t, w_out_t, b_out,
                         heads=heads, dim_head=dim_head)
    y = jax.block_until_ready(y)

    y_ref = attention_reference(x, w_qkv_t, w_out_t, b_out,
                                heads=heads, dim_head=dim_head)

    assert y.shape == (B, N, dim), y.shape
    max_err = float(jnp.max(jnp.abs(y.astype(jnp.float32) - y_ref)))
    # bf16 matmul operands + approx reciprocal -> relaxed tolerance vs f32 ref.
    assert max_err < 5e-2, max_err
    print("KERNEL_OK")
</pallas_src>

<mosaic_0001>
module attributes {stable_mosaic.version = 11 : i64} {
  func.func @_qkv_proj_kernel(%arg0: i32, %arg1: i32, %arg2: memref<1x16x128xbf16, #tpu.memory_space<vmem>>, %arg3: memref<128x384xbf16, #tpu.memory_space<vmem>>, %arg4: memref<1x16x384xbf16, #tpu.memory_space<vmem>>) attributes {dimension_semantics = [#tpu.dimension_semantics<parallel>, #tpu.dimension_semantics<parallel>], iteration_bounds = array<i64: 2, 1>, scalar_prefetch = 0 : i64, scratch_operands = 0 : i64, tpu.core_type = #tpu.core_type<tc>, window_params = [{transform_indices = @transform_0, window_bounds = array<i64: 1, 16, 128>}, {pipeline_mode = #tpu.pipeline_mode<synchronous>, transform_indices = @transform_1, window_bounds = array<i64: 128, 384>}, {transform_indices = @transform_2, window_bounds = array<i64: 1, 16, 384>}]} {
    %c0 = arith.constant 0 : index
    %c0_0 = arith.constant 0 : index
    %c0_1 = arith.constant 0 : index
    %0 = vector.load %arg2[%c0, %c0_0, %c0_1] : memref<1x16x128xbf16, #tpu.memory_space<vmem>>, vector<1x16x128xbf16>
    %1 = vector.shape_cast %0 : vector<1x16x128xbf16> to vector<16x128xbf16>
    %c0_2 = arith.constant 0 : index
    %c0_3 = arith.constant 0 : index
    %2 = vector.load %arg3[%c0_2, %c0_3] : memref<128x384xbf16, #tpu.memory_space<vmem>>, vector<128x384xbf16>
    %cst = arith.constant dense<0.000000e+00> : vector<16x384xf32>
    %3 = tpu.matmul %1, %2, %cst {dimension_numbers = #tpu.dot_dimension_numbers<[1], [0], [0], [1], [0, 0, 1, 1], [], []>} : vector<16x128xbf16>, vector<128x384xbf16>, vector<16x384xf32> -> vector<16x384xf32>
    %4 = arith.truncf %3 : vector<16x384xf32> to vector<16x384xbf16>
    %c0_4 = arith.constant 0 : index
    %c0_5 = arith.constant 0 : index
    %c0_6 = arith.constant 0 : index
    %5 = vector.load %arg4[%c0_4, %c0_5, %c0_6] : memref<1x16x384xbf16, #tpu.memory_space<vmem>>, vector<1x16x384xbf16>
    %6 = vector.shape_cast %5 : vector<1x16x384xbf16> to vector<16x384xbf16>
    %7 = vector.shape_cast %4 : vector<16x384xbf16> to vector<1x16x384xbf16>
    tpu.vector_store %arg4[%c0_4, %c0_5, %c0_6], %7 {strides = array<i32>} : memref<1x16x384xbf16, #tpu.memory_space<vmem>>, vector<1x16x384xbf16>,
    return
  }
  func.func @transform_0(%arg0: i32, %arg1: i32) -> (i32, i32, i32) {
    %c0_i32 = arith.constant 0 : i32
    %c0_i32_0 = arith.constant 0 : i32
    return %arg0, %arg1, %c0_i32 : i32, i32, i32
  }
  func.func @transform_1(%arg0: i32, %arg1: i32) -> (i32, i32) {
    %c0_i32 = arith.constant 0 : i32
    %c0_i32_0 = arith.constant 0 : i32
    %c0_i32_1 = arith.constant 0 : i32
    return %c0_i32, %c0_i32_0 : i32, i32
  }
  func.func @transform_2(%arg0: i32, %arg1: i32) -> (i32, i32, i32) {
    %c0_i32 = arith.constant 0 : i32
    %c0_i32_0 = arith.constant 0 : i32
    return %arg0, %arg1, %c0_i32 : i32, i32, i32
  }
}

</mosaic_0001>

<llo_original>
// kernel: tpu_custom_call.1
$region0: #{tpu_custom_call.1}
  #allocation0 [shape = 'u32[]', space=smem, size = 0x4, offset = 0x4, fixed_abs, tag = 'smem constant byte address 0x4 - core index']
  #allocation1 [shape = 'u32[144,128]{1,0:T(1,128)}', space=vmem, size = 0x12000, scoped, tag = 'internal scratch']
  %s0 = inlined_call_operand.hbm [shape: bf16[2,16,128], index: 0, kind: input, shape index: {}]
  %s1 = inlined_call_operand.hbm [shape: bf16[128,384], index: 1, kind: input, shape index: {}]
  %s2 = inlined_call_operand.hbm [shape: bf16[2,16,384], index: 2, kind: output, shape index: {}]
  %s3 = sld [smem:[#allocation0]]
  $region49: #{tpu_custom_call.1} parent=0
    _
  %s5 = ssub.s32 1, %s3
  %s6 = scalar_select 0, %s5, %s3
  $region1: #{tpu_custom_call.1} parent=0
    #allocation2 [shape = 'u8[8192]{0}', space=vmem, size = 0x2000, scoped, tag = 'input window, operand 0']
    #allocation3 [shape = 's32[2]{0}', space=sflag, size = 0x8, scoped, tag = 'scoped memory for tpu_custom_call.1']
    #allocation4 [shape = 's32[2]{0}', space=sflag, size = 0x8, scoped, tag = 'scoped memory for tpu_custom_call.1']
    #allocation5 [shape = 'u8[98304]{0}', space=vmem, size = 0x18000, scoped, tag = 'input window, operand 1, single buffered']
    #allocation6 [shape = 's32[1]{0}', space=sflag, size = 0x4, scoped, tag = 'scoped memory for tpu_custom_call.1']
    #allocation7 [shape = 'u8[24576]{0}', space=vmem, size = 0x6000, scoped, tag = 'output window, operand 0']
    %7 = vsyncpa [#allocation3], 0
    %s8 = scalar_lea.sflag [#allocation3], 1
    %9 = vsyncpa %s8, 0
    %10 = vsyncpa [#allocation6], 0
    %11 = vsyncpa [#allocation4], 0
    %s12 = scalar_lea.sflag [#allocation4], 1
    %13 = vsyncpa %s12, 0
    loop: start=0, step=1, limit=4
    $region2: #{tpu_custom_call.1} parent=1 // loop_pre_header
      _
    $region3: #{tpu_custom_call.1} parent=1 // loop_header
      %s15 = sphi 0, %s19
      %p16 = scmp.ge.s32.totalorder %s15, 4
      %s22 = sphi 0, %s34
      %s23 = sphi 0, %s30
      %s24 = sphi 0, %s22
      %s25 = sphi 0, %s23
      %s26 = sphi 0, %s24
      %s27 = sphi 0, %s25
      %s39 = sphi 0, %s41
      %s42 = sphi 0, %s39
      %s43 = sphi 0, %s42
      %s59 = sphi 0, %s43
      %s63 = sphi 0, %s63
      %s65 = sphi 0, %s63
      %s66 = sphi 0, %s65
      %s80 = sphi 0, %s66
      %s88 = sphi 0, %s90
      %s91 = sphi 0, %s88
      %s92 = sphi 0, %s91
      %s108 = sphi 0, %s92
    $region4: #{tpu_custom_call.1} parent=1 // loop_header_branch
      %18 = sbr.rel (%p16) target = $region8
    $region5: #{tpu_custom_call.1} parent=1 // loop_body
      %s20 = ssub.s32 %s15, 1
      %s21 = ssub.s32 %s15, 2
      %s28 = sadd.s32 1, %s23
      %p29 = scmp.ge.s32.totalorder %s28, 1
      %s30 = scalar_select %p29, 0, %s28
      %s31 = sadd.s32 1, %s22
      %s32 = scalar_select %p29, %s31, %s22
      %p33 = scmp.ge.s32.totalorder %s32, 2
      %s34 = scalar_select %p33, 0, %s32
      %s35 = ssub.s32 %s22, %s34
      %s36 = ssub.s32 %s23, %s30
      %s37 = sor.u32 %s35, %s36
      %p38 = scmp.eq.s32.totalorder %s37, 0
      %s40 = sadd.s32 %s39, 1
      %s41 = scalar_select %p38, %s39, %s40
      %p44 = pneg %p38
      %p45 = scmp.eq.s32.totalorder %s15, 1
      %p46 = por %p44, %p45
      %p47 = scmp.ne.s32.totalorder %s39, %s42
      %p48 = scmp.eq.s32.totalorder %s15, 0
      %p49 = por %p47, %p48
      %p50 = scmp.ne.s32.totalorder %s39, %s42
      %p51 = scmp.eq.s32.totalorder %s20, 1
      %p52 = por %p50, %p51
      %p53 = scmp.ne.s32.totalorder %s42, %s43
      %p54 = scmp.eq.s32.totalorder %s20, 0
      %p55 = por %p53, %p54
      %p56 = scmp.ne.s32.totalorder %s42, %s43
      %p57 = scmp.eq.s32.totalorder %s21, 1
      %p58 = por %p56, %p57
      %p60 = scmp.ne.s32.totalorder %s43, %s59
      %p61 = scmp.eq.s32.totalorder %s21, 0
      %p62 = por %p60, %p61
      %s64 = sadd.s32 %s63, 1
      %p67 = scmp.eq.s32.totalorder %s15, 1
      %p68 = scmp.ne.s32.totalorder %s63, %s65
      %p69 = scmp.eq.s32.totalorder %s15, 0
      %p70 = por %p68, %p69
      %p71 = scmp.ne.s32.totalorder %s63, %s65
      %p72 = scmp.eq.s32.totalorder %s20, 1
      %p73 = por %p71, %p72
      %p74 = scmp.ne.s32.totalorder %s65, %s66
      %p75 = scmp.eq.s32.totalorder %s20, 0
      %p76 = por %p74, %p75
      %p77 = scmp.ne.s32.totalorder %s65, %s66
      %p78 = scmp.eq.s32.totalorder %s21, 1
      %p79 = por %p77, %p78
      %p81 = scmp.ne.s32.totalorder %s66, %s80
      %p82 = scmp.eq.s32.totalorder %s21, 0
      %p83 = por %p81, %p82
      %s84 = ssub.s32 %s22, %s34
      %s85 = ssub.s32 %s23, %s30
      %s86 = sor.u32 %s84, %s85
      %p87 = scmp.eq.s32.totalorder %s86, 0
      %s89 = sadd.s32 %s88, 1
      %s90 = scalar_select %p87, %s88, %s89
      %p93 = pneg %p87
      %p94 = scmp.eq.s32.totalorder %s15, 1
      %p95 = por %p93, %p94
      %p96 = scmp.ne.s32.totalorder %s88, %s91
      %p97 = scmp.eq.s32.totalorder %s15, 0
      %p98 = por %p96, %p97
      %p99 = scmp.ne.s32.totalorder %s88, %s91
      %p100 = scmp.eq.s32.totalorder %s20, 1
      %p101 = por %p99, %p100
      %p102 = scmp.ne.s32.totalorder %s91, %s92
      %p103 = scmp.eq.s32.totalorder %s20, 0
      %p104 = por %p102, %p103
      %p105 = scmp.ne.s32.totalorder %s91, %s92
      %p106 = scmp.eq.s32.totalorder %s21, 1
      %p107 = por %p105, %p106
      %p109 = scmp.ne.s32.totalorder %s92, %s108
      %p110 = scmp.eq.s32.totalorder %s21, 0
      %p111 = por %p109, %p110
      %p112 = scmp.le.s32.totalorder 1, %s15
      %p113 = scmp.lt.s32.totalorder %s15, 3
      %p114 = pnand %p112, %p113
      %p115 = pneg %p114
      // Predicated region
      $region9: #{tpu_custom_call.1} parent=5 // pred_check
        _
      $region10: #{tpu_custom_call.1} parent=5 // pred_check_branch
        %117 = sbr.rel (%p114) target = $region12
      $region11: #{tpu_custom_call.1} parent=5 // pred_region
        %s118 = ssub.s32 %s15, 1
        // Predicated region
        $region13: #{tpu_custom_call.1} parent=11 // pred_check
          %p119 = pneg %p76
        $region14: #{tpu_custom_call.1} parent=11 // pred_check_branch
          %121 = sbr.rel (%p119) target = $region16
        $region15: #{tpu_custom_call.1} parent=11 // pred_region
          %s123 = ssub.s32 3072, 3072
          %124 = vsyncadd [#allocation6], %s123
          %s125 = sshll.u32 [#allocation5], 4
          %s126 = int_to_ptr.vmem [resolvable:$true] %s125
          %131 = dma.hbm_to_vmem [thread:$0]  %s1, 3072, %s126, [#allocation6], 192, 192, 12
        $region16: #{tpu_custom_call.1} parent=11 // pred_fallthru
          _
      $region12: #{tpu_custom_call.1} parent=5 // pred_fallthru
        _
      %p132 = scmp.lt.s32.totalorder %s15, 2
      // Predicated region
      $region17: #{tpu_custom_call.1} parent=5 // pred_check
        %p133 = pneg %p132
      $region18: #{tpu_custom_call.1} parent=5 // pred_check_branch
        %135 = sbr.rel (%p133) target = $region20
      $region19: #{tpu_custom_call.1} parent=5 // pred_region
        // Predicated region
        $region21: #{tpu_custom_call.1} parent=19 // pred_check
          %p136 = pneg %p49
        $region22: #{tpu_custom_call.1} parent=19 // pred_check_branch
          %138 = sbr.rel (%p136) target = $region24
        $region23: #{tpu_custom_call.1} parent=19 // pred_region
          %s139 = sand.u32 %s39, 1
          %s140 = scalar_lea.sflag [#allocation3], %s139
          %s141 = sand.u32 %s39, 1
          %s142 = smul.addr %s141, 8
          %s143 = scalar_lea.vmem [#allocation2], %s142
          %s144 = smul.u32 2, %s23
          %s146 = ssub.s32 128, 128
          %147 = vsyncadd %s140, %s146
          %s148 = smul.addr %s22, 2
          %s149 = sadd.s32 %s144, %s148
          %s150 = smul.addr %s149, 64
          %s151 = scalar_lea.hbm %s0, %s150
          %s152 = sshll.u32 %s143, 4
          %s153 = int_to_ptr.vmem [resolvable:$true] %s152
          %158 = dma.hbm_to_vmem [thread:$0]  %s151, 128, %s153, %s140, 64, 64, 4
        $region24: #{tpu_custom_call.1} parent=19 // pred_fallthru
          _
      $region20: #{tpu_custom_call.1} parent=5 // pred_fallthru
        _
      %p159 = scmp.le.s32.totalorder 1, %s15
      %p160 = scmp.lt.s32.totalorder %s15, 3
      %p161 = pnand %p159, %p160
      %p162 = pneg %p161
      // Predicated region
      $region25: #{tpu_custom_call.1} parent=5 // pred_check
        _
      $region26: #{tpu_custom_call.1} parent=5 // pred_check_branch
        %164 = sbr.rel (%p161) target = $region28
      $region27: #{tpu_custom_call.1} parent=5 // pred_region
        %s165 = ssub.s32 %s15, 1
        %s166 = sand.u32 %s42, 1
        %s167 = scalar_lea.sflag [#allocation3], %s166
        %s168 = sand.u32 %s42, 1
        %s169 = smul.addr %s168, 8
        %s170 = scalar_lea.vmem [#allocation2], %s169
        // Predicated region
        $region29: #{tpu_custom_call.1} parent=27 // pred_check
          %p171 = pneg %p55
        $region30: #{tpu_custom_call.1} parent=27 // pred_check_branch
          %173 = sbr.rel (%p171) target = $region32
        $region31: #{tpu_custom_call.1} parent=27 // pred_region
          %174 = dma.done %s167, 128
        $region32: #{tpu_custom_call.1} parent=27 // pred_fallthru
          _
        // Predicated region
        $region33: #{tpu_custom_call.1} parent=27 // pred_check
          %p175 = pneg %p76
        $region34: #{tpu_custom_call.1} parent=27 // pred_check_branch
          %177 = sbr.rel (%p175) target = $region36
        $region35: #{tpu_custom_call.1} parent=27 // pred_region
          %178 = dma.done [#allocation6], 3072
        $region36: #{tpu_custom_call.1} parent=27 // pred_fallthru
          _
        %s179 = sand.u32 %s42, 1
        %s180 = scalar_lea.sflag [#allocation3], %s179
        %s181 = sand.u32 %s42, 1
        %s182 = smul.addr %s181, 8
        %s183 = scalar_lea.vmem [#allocation2], %s182
        %p184 = pneg %p55
        %p185 = pneg %p52
        %p186 = pneg %p76
        %p187 = pneg %p73
        %p188 = pneg %p104
        %p189 = pneg %p101
        %s190 = sand.u32 %s91, 1
        %s191 = scalar_lea.sflag [#allocation4], %s190
        %s192 = sand.u32 %s91, 1
        %s193 = smul.addr %s192, 24
        %s194 = scalar_lea.vmem [#allocation7], %s193
        %s195 = smul.u32 2, %s25
        %s196 = smul.u32 2, %s25
        %v198 = vld [vmem:[%s170] sm:$0xf]
        %v199 = vld [vmem:[%s170 + $0x4] sm:$0xf]
        %v200 = vld [vmem:[#allocation5] sm:$0xff]
        %v201 = vld [vmem:[#allocation5 + $0x8] sm:$0xf]
        %v202 = vld [vmem:[#allocation5 + $0xc] sm:$0xff]
        %v203 = vld [vmem:[#allocation5 + $0x14] sm:$0xf]
        %v204 = vld [vmem:[#allocation5 + $0x18] sm:$0xff]
        %v205 = vld [vmem:[#allocation5 + $0x20] sm:$0xf]
        %v206 = vld [vmem:[#allocation5 + $0x24] sm:$0xff]
        %v207 = vld [vmem:[#allocation5 + $0x2c] sm:$0xf]
        %v208 = vld [vmem:[#allocation5 + $0x30] sm:$0xff]
        %v209 = vld [vmem:[#allocation5 + $0x38] sm:$0xf]
        %v210 = vld [vmem:[#allocation5 + $0x3c] sm:$0xff]
        %v211 = vld [vmem:[#allocation5 + $0x44] sm:$0xf]
        %v212 = vld [vmem:[#allocation5 + $0x48] sm:$0xff]
        %v213 = vld [vmem:[#allocation5 + $0x50] sm:$0xf]
        %v214 = vld [vmem:[#allocation5 + $0x54] sm:$0xff]
        %v215 = vld [vmem:[#allocation5 + $0x5c] sm:$0xf]
        %v216 = vld [vmem:[#allocation5 + $0x60] sm:$0xff]
        %v217 = vld [vmem:[#allocation5 + $0x68] sm:$0xf]
        %v218 = vld [vmem:[#allocation5 + $0x6c] sm:$0xff]
        %v219 = vld [vmem:[#allocation5 + $0x74] sm:$0xf]
        %v220 = vld [vmem:[#allocation5 + $0x78] sm:$0xff]
        %v221 = vld [vmem:[#allocation5 + $0x80] sm:$0xf]
        %v222 = vld [vmem:[#allocation5 + $0x84] sm:$0xff]
        %v223 = vld [vmem:[#allocation5 + $0x8c] sm:$0xf]
        %v224 = vld [vmem:[#allocation5 + $0x90] sm:$0xff]
        %v225 = vld [vmem:[#allocation5 + $0x98] sm:$0xf]
        %v226 = vld [vmem:[#allocation5 + $0x9c] sm:$0xff]
        %v227 = vld [vmem:[#allocation5 + $0xa4] sm:$0xf]
        %v228 = vld [vmem:[#allocation5 + $0xa8] sm:$0xff]
        %v229 = vld [vmem:[#allocation5 + $0xb0] sm:$0xf]
        %v230 = vld [vmem:[#allocation5 + $0xb4] sm:$0xff]
        %v231 = vld [vmem:[#allocation5 + $0xbc] sm:$0xf]
        %v234 = vunpack.c.l.b16 %v198
        %v235 = vunpack.c.l.b16 %v199
        %v236 = vpack.c.b16 %v235, %v234
        %v270 = vunpack.c.l.b16 %v200
        %v271 = vunpack.c.h.b16 %v200
        %v272 = vunpack.c.l.b16 %v201
        %v273 = vunpack.c.l.b16 %v202
        %v274 = vunpack.c.h.b16 %v202
        %v275 = vunpack.c.l.b16 %v203
        %v276 = vunpack.c.l.b16 %v204
        %v277 = vunpack.c.h.b16 %v204
        %v278 = vunpack.c.l.b16 %v205
        %v279 = vunpack.c.l.b16 %v206
        %v280 = vunpack.c.h.b16 %v206
        %v281 = vunpack.c.l.b16 %v207
        %v282 = vunpack.c.l.b16 %v208
        %v283 = vunpack.c.h.b16 %v208
        %v284 = vunpack.c.l.b16 %v209
        %v285 = vunpack.c.l.b16 %v210
        %v286 = vunpack.c.h.b16 %v210
        %v287 = vunpack.c.l.b16 %v211
        %v288 = vunpack.c.l.b16 %v212
        %v289 = vunpack.c.h.b16 %v212
        %v290 = vunpack.c.l.b16 %v213
        %v291 = vunpack.c.l.b16 %v214
        %v292 = vunpack.c.h.b16 %v214
        %v293 = vunpack.c.l.b16 %v215
        %v294 = vunpack.c.l.b16 %v216
        %v295 = vunpack.c.h.b16 %v216
        %v296 = vunpack.c.l.b16 %v217
        %v297 = vunpack.c.l.b16 %v218
        %v298 = vunpack.c.h.b16 %v218
        %v299 = vunpack.c.l.b16 %v219
        %v300 = vunpack.c.l.b16 %v220
        %v301 = vunpack.c.h.b16 %v220
        %v302 = vunpack.c.l.b16 %v221
        %v303 = vunpack.c.l.b16 %v222
        %v304 = vunpack.c.h.b16 %v222
        %v305 = vunpack.c.l.b16 %v223
        %v306 = vunpack.c.l.b16 %v224
        %v307 = vunpack.c.h.b16 %v224
        %v308 = vunpack.c.l.b16 %v225
        %v309 = vunpack.c.l.b16 %v226
        %v310 = vunpack.c.h.b16 %v226
        %v311 = vunpack.c.l.b16 %v227
        %v312 = vunpack.c.l.b16 %v228
        %v313 = vunpack.c.h.b16 %v228
        %v314 = vunpack.c.l.b16 %v229
        %v315 = vunpack.c.l.b16 %v230
        %v316 = vunpack.c.h.b16 %v230
        %v317 = vunpack.c.l.b16 %v231
        %v318 = vpack.c.b16 %v273, %v270
        %v319 = vpack.c.b16 %v274, %v271
        %v320 = vpack.c.b16 %v275, %v272
        %v321 = vpack.c.b16 %v279, %v276
        %v322 = vpack.c.b16 %v280, %v277
        %v323 = vpack.c.b16 %v281, %v278
        %v324 = vpack.c.b16 %v285, %v282
        %v325 = vpack.c.b16 %v286, %v283
        %v326 = vpack.c.b16 %v287, %v284
        %v327 = vpack.c.b16 %v291, %v288
        %v328 = vpack.c.b16 %v292, %v289
        %v329 = vpack.c.b16 %v293, %v290
        %v330 = vpack.c.b16 %v297, %v294
        %v331 = vpack.c.b16 %v298, %v295
        %v332 = vpack.c.b16 %v299, %v296
        %v333 = vpack.c.b16 %v303, %v300
        %v334 = vpack.c.b16 %v304, %v301
        %v335 = vpack.c.b16 %v305, %v302
        %v336 = vpack.c.b16 %v309, %v306
        %v337 = vpack.c.b16 %v310, %v307
        %v338 = vpack.c.b16 %v311, %v308
        %v339 = vpack.c.b16 %v315, %v312
        %v340 = vpack.c.b16 %v316, %v313
        %v341 = vpack.c.b16 %v317, %v314
        %366 = vmatprep.subr.bf16.mxu0 %v340
        %367 = vmatpush1.bf16.msra.mxu0 %v339
        %368 = vmatprep.subr.bf16.mxu0 %v337
        %369 = vmatpush1.bf16.msra.mxu0 %v336
        %370 = vmatprep.subr.bf16.mxu0 %v334
        %371 = vmatpush1.bf16.msra.mxu0 %v333
        %372 = vmatprep.subr.bf16.mxu0 %v331
        %373 = vmatpush1.bf16.msra.mxu0 %v330
        %374 = vmatprep.subr.bf16.mxu0 %v328
        %375 = vmatpush1.bf16.msra.mxu0 %v327
        %376 = vmatprep.subr.bf16.mxu0 %v325
        %377 = vmatpush1.bf16.msra.mxu0 %v324
        %378 = vmatprep.subr.bf16.mxu0 %v322
        %379 = vmatpush1.bf16.msra.mxu0 %v321
        %380 = vmatprep.subr.bf16.mxu0 %v319
        %381 = vmatpush1.bf16.msra.mxu0 %v318
        %382 = vmatprep.subr.bf16.mxu0 0
        %383 = vmatpush2.bf16.msra.mxu0 0
        %384 = vmatprep.subr.bf16.mxu0 0
        %385 = vmatpush2.bf16.msra.mxu0 0
        %386 = vmatprep.subr.bf16.mxu0 0
        %387 = vmatpush2.bf16.msra.mxu0 0
        %388 = vmatprep.subr.bf16.mxu0 0
        %389 = vmatpush2.bf16.msra.mxu0 0
        %390 = vmatprep.subr.bf16.mxu0 0
        %391 = vmatpush2.bf16.msra.mxu0 0
        %392 = vmatprep.subr.bf16.mxu0 0
        %393 = vmatpush2.bf16.msra.mxu0 0
        %394 = vmatprep.subr.bf16.mxu0 0
        %395 = vmatpush2.bf16.msra.mxu0 0
        %396 = vmatprep.subr.bf16.mxu0 0
        %397 = vmatpush2.bf16.msra.mxu0 0
        %398 = vmatprep.mubr.bf16.mxu0 0
        %399 = vmatmul.mubr.bf16.gmra.mxu0 %v236
        %v400 = vpop.f32.mrf.mxu0
        %v401 = vadd.f32 0.0, %v400
        %v402 = vpop.f32.mrf.mxu0
        %v403 = vadd.f32 0.0, %v402
        %v404 = vpop.f32.mrf.mxu0
        %v405 = vadd.f32 0.0, %v404
        %v406 = vpop.f32.mrf.mxu0
        %v407 = vadd.f32 0.0, %v406
        %408 = vdwg.mxu0
        %409 = vmatprep.subr.bf16.mxu0 0
        %410 = vmatpush1.bf16.msra.mxu0 %v341
        %411 = vmatprep.subr.bf16.mxu0 0
        %412 = vmatpush1.bf16.msra.mxu0 %v338
        %413 = vmatprep.subr.bf16.mxu0 0
        %414 = vmatpush1.bf16.msra.mxu0 %v335
        %415 = vmatprep.subr.bf16.mxu0 0
        %416 = vmatpush1.bf16.msra.mxu0 %v332
        %417 = vmatprep.subr.bf16.mxu0 0
        %418 = vmatpush1.bf16.msra.mxu0 %v329
        %419 = vmatprep.subr.bf16.mxu0 0
        %420 = vmatpush1.bf16.msra.mxu0 %v326
        %421 = vmatprep.subr.bf16.mxu0 0
        %422 = vmatpush1.bf16.msra.mxu0 %v323
        %423 = vmatprep.subr.bf16.mxu0 0
        %424 = vmatpush1.bf16.msra.mxu0 %v320
        %425 = vmatprep.subr.bf16.mxu0 0
        %426 = vmatpush2.bf16.msra.mxu0 0
        %427 = vmatprep.subr.bf16.mxu0 0
        %428 = vmatpush2.bf16.msra.mxu0 0
        %429 = vmatprep.subr.bf16.mxu0 0
        %430 = vmatpush2.bf16.msra.mxu0 0
        %431 = vmatprep.subr.bf16.mxu0 0
        %432 = vmatpush2.bf16.msra.mxu0 0
        %433 = vmatprep.subr.bf16.mxu0 0
        %434 = vmatpush2.bf16.msra.mxu0 0
        %435 = vmatprep.subr.bf16.mxu0 0
        %436 = vmatpush2.bf16.msra.mxu0 0
        %437 = vmatprep.subr.bf16.mxu0 0
        %438 = vmatpush2.bf16.msra.mxu0 0
        %439 = vmatprep.subr.bf16.mxu0 0
        %440 = vmatpush2.bf16.msra.mxu0 0
        %441 = vmatprep.mubr.bf16.mxu0 0
        %442 = vmatmul.mubr.bf16.gmra.mxu0 %v236
        %v443 = vpop.f32.mrf.mxu0
        %v444 = vadd.f32 0.0, %v443
        %v445 = vpop.f32.mrf.mxu0
        %v446 = vpop.f32.mrf.mxu0
        %v447 = vadd.f32 0.0, %v446
        %v448 = vpop.f32.mrf.mxu0
        %449 = vdwg.mxu0
        %v450 = vpack.c.bf16 %v405, %v401
        %v451 = vpack.c.bf16 %v407, %v403
        %v452 = vpack.c.bf16 %v447, %v444
        %v456 = vunpack.c.l.b16 %v450
        %v457 = vunpack.c.l.b16 %v451
        %v458 = vunpack.c.l.b16 %v452
        %v459 = vunpack.c.h.b16 %v450
        %v460 = vunpack.c.h.b16 %v451
        %v461 = vunpack.c.h.b16 %v452
        %v462 = vpack.c.b16 %v457, %v456
        %v463 = vpack.c.b16 %v458, %v458
        %v464 = vpack.c.b16 %v460, %v459
        %v465 = vpack.c.b16 %v461, %v461
        %470 = vst [vmem:[%s194] sm:$0xff] %v462
        %471 = vst [vmem:[%s194 + $0x8] sm:$0xf] %v463
        %472 = vst [vmem:[%s194 + $0xc] sm:$0xff] %v464
        %473 = vst [vmem:[%s194 + $0x14] sm:$0xf] %v465
        %s474 = sand.u32 %s91, 1
        %s475 = scalar_lea.sflag [#allocation4], %s474
        %s476 = sand.u32 %s91, 1
        %s477 = smul.addr %s476, 24
        %s478 = scalar_lea.vmem [#allocation7], %s477
        // Predicated region
        $region37: #{tpu_custom_call.1} parent=27 // pred_check
          %p479 = pneg %p101
        $region38: #{tpu_custom_call.1} parent=27 // pred_check_branch
          %481 = sbr.rel (%p479) target = $region40
        $region39: #{tpu_custom_call.1} parent=27 // pred_region
          %s482 = smul.u32 2, %s25
          %s484 = ssub.s32 384, 384
          %485 = vsyncadd %s475, %s484
          %s486 = smul.addr %s482, 3
          %s487 = smul.addr %s24, 6
          %s488 = sadd.s32 %s486, %s487
          %s489 = smul.addr %s488, 64
          %s490 = scalar_lea.hbm %s2, %s489
          %s491 = sshll.u32 %s478, 4
          %s492 = int_to_ptr.vmem [resolvable:$true] %s491
          %497 = dma.vmem_to_hbm [thread:$0]  %s492, 384, %s490, %s475, 192, 192, 12
        $region40: #{tpu_custom_call.1} parent=27 // pred_fallthru
          _
      $region28: #{tpu_custom_call.1} parent=5 // pred_fallthru
        _
      %p498 = scmp.le.s32.totalorder 2, %s15
      // Predicated region
      $region41: #{tpu_custom_call.1} parent=5 // pred_check
        %p499 = pneg %p498
      $region42: #{tpu_custom_call.1} parent=5 // pred_check_branch
        %501 = sbr.rel (%p499) target = $region44
      $region43: #{tpu_custom_call.1} parent=5 // pred_region
        %s502 = ssub.s32 %s15, 2
        // Predicated region
        $region45: #{tpu_custom_call.1} parent=43 // pred_check
          %p503 = pneg %p107
        $region46: #{tpu_custom_call.1} parent=43 // pred_check_branch
          %505 = sbr.rel (%p503) target = $region48
        $region47: #{tpu_custom_call.1} parent=43 // pred_region
          %s506 = sand.u32 %s92, 1
          %s507 = scalar_lea.sflag [#allocation4], %s506
          %s508 = sand.u32 %s92, 1
          %s509 = smul.addr %s508, 24
          %s510 = scalar_lea.vmem [#allocation7], %s509
          %511 = dma.done %s507, 384
        $region48: #{tpu_custom_call.1} parent=43 // pred_fallthru
          _
      $region44: #{tpu_custom_call.1} parent=5 // pred_fallthru
        _
    $region6: #{tpu_custom_call.1} parent=1 // loop_footer
      %s19 = sadd.s32 1, %s15
    $region7: #{tpu_custom_call.1} parent=1 // loop_footer_branch
      %14 = sbr.rel target = $region3
    $region8: #{tpu_custom_call.1} parent=1 // loop_exit
      _
    %512 = vsyncpa [#allocation3], 1
    %s513 = scalar_lea.sflag [#allocation3], 1
    %514 = vsyncpa %s513, 1
    %515 = vsyncpa [#allocation6], 1
    %516 = vsyncpa [#allocation4], 1
    %s517 = scalar_lea.sflag [#allocation4], 1
    %518 = vsyncpa %s517, 1

</llo_original>
